<compile_context>
chip_gen: v6e
topology: v6e:2x2x1
jax: 0.10.0
libtpu: 0.0.40
codegen_flags: <defaults>
</compile_context>

<pallas_src>
import functools

import jax
import jax.numpy as jnp
from jax import lax
from jax.experimental import pallas as pl
from jax.experimental.pallas import tpu as pltpu


_VMEM_LIMIT = 48 * 1024 * 1024   # fits v7x's 64 MiB VMEM with headroom


def _round_up(x: int, m: int) -> int:
    return ((x + m - 1) // m) * m


def _row_tile(rows: int, in_dim: int, itemsize: int,
              *, target_bytes: int = 4 << 20, cap: int = 4096):
    """Row tile: ~target_bytes input tile (HBM-roofline sized), multiple of 8."""
    tm = max(8, min(cap, target_bytes // max(1, in_dim * itemsize)))
    tm = _round_up(min(tm, rows), 8)
    rows_p = _round_up(rows, tm)
    return tm, rows_p


# --------------------------------------------------------------------------
# Dense kernel:  y = x @ W + b   with W already (in, out).  Row-tiled.
# --------------------------------------------------------------------------
def _dense_kernel(x_ref, w_ref, b_ref, o_ref):
    # x: (TM, in)   w: (in, out)   b: (1, out)   o: (TM, out)
    acc = lax.dot_general(
        x_ref[...], w_ref[...],
        dimension_numbers=(((1,), (0,)), ((), ())),
        preferred_element_type=jnp.float32)
    o_ref[...] = (acc + b_ref[...].astype(jnp.float32)).astype(o_ref.dtype)
    # TODO(synk): training-mode dropout (hidden_dropout_prob) would use
    # pltpu.prng_seed + pltpu.prng_random_bits; eval mode is identity.


def _dense(x2d, w_in_out, bias):
    rows, in_dim = x2d.shape
    out_dim = w_in_out.shape[1]
    itemsize = jnp.dtype(x2d.dtype).itemsize
    tm, rows_p = _row_tile(rows, in_dim, itemsize)
    if rows_p != rows:  # only triggers on ragged shapes; Segformer rows divide
        x2d = jnp.pad(x2d, ((0, rows_p - rows), (0, 0)))

    out = pl.pallas_call(
        _dense_kernel,
        out_shape=jax.ShapeDtypeStruct((rows_p, out_dim), x2d.dtype),
        grid=(rows_p // tm,),
        in_specs=[
            pl.BlockSpec((tm, in_dim), lambda i: (i, 0)),
            pl.BlockSpec((in_dim, out_dim), lambda i: (0, 0)),
            pl.BlockSpec((1, out_dim), lambda i: (0, 0)),
        ],
        out_specs=pl.BlockSpec((tm, out_dim), lambda i: (i, 0)),
        compiler_params=pltpu.CompilerParams(
            dimension_semantics=("parallel",),
            vmem_limit_bytes=_VMEM_LIMIT),
        cost_estimate=pl.CostEstimate(
            flops=2 * rows_p * in_dim * out_dim,
            transcendentals=0,
            bytes_accessed=itemsize * (rows_p * in_dim + in_dim * out_dim
                                       + out_dim + rows_p * out_dim)),
    )(x2d, w_in_out, bias.reshape(1, out_dim))
    return out[:rows] if rows_p != rows else out


# --------------------------------------------------------------------------
# Fused sequence-reduction conv (patch matmul) + bias + LayerNorm + K/V proj.
# --------------------------------------------------------------------------
def _sr_ln_kv_kernel(p_ref, wsr_ref, bsr_ref, g_ref, beta_ref,
                     wkv_ref, bkv_ref, o_ref, *, eps):
    # p: (TM, sr*sr*H)  wsr: (sr*sr*H, H)  wkv: (H, 2H)  o: (TM, 2H)
    acc = lax.dot_general(
        p_ref[...], wsr_ref[...],
        dimension_numbers=(((1,), (0,)), ((), ())),
        preferred_element_type=jnp.float32)
    acc = acc + bsr_ref[...].astype(jnp.float32)
    mean = jnp.mean(acc, axis=-1, keepdims=True)
    c = acc - mean
    var = jnp.mean(c * c, axis=-1, keepdims=True)
    ln = c * lax.rsqrt(var + eps)
    ln = ln * g_ref[...].astype(jnp.float32) + beta_ref[...].astype(jnp.float32)
    kv = lax.dot_general(
        ln.astype(wkv_ref.dtype), wkv_ref[...],
        dimension_numbers=(((1,), (0,)), ((), ())),
        preferred_element_type=jnp.float32)
    o_ref[...] = (kv + bkv_ref[...].astype(jnp.float32)).astype(o_ref.dtype)


def _sr_ln_kv(patches, wsr_t, b_sr, gamma, beta, wkv_t, bkv, *, eps):
    rows, pdim = patches.shape
    H = wsr_t.shape[1]
    out_dim = wkv_t.shape[1]
    itemsize = jnp.dtype(patches.dtype).itemsize
    tm, rows_p = _row_tile(rows, pdim, itemsize)
    if rows_p != rows:
        patches = jnp.pad(patches, ((0, rows_p - rows), (0, 0)))

    out = pl.pallas_call(
        functools.partial(_sr_ln_kv_kernel, eps=eps),
        out_shape=jax.ShapeDtypeStruct((rows_p, out_dim), patches.dtype),
        grid=(rows_p // tm,),
        in_specs=[
            pl.BlockSpec((tm, pdim), lambda i: (i, 0)),
            pl.BlockSpec((pdim, H), lambda i: (0, 0)),
            pl.BlockSpec((1, H), lambda i: (0, 0)),
            pl.BlockSpec((1, H), lambda i: (0, 0)),
            pl.BlockSpec((1, H), lambda i: (0, 0)),
            pl.BlockSpec((H, out_dim), lambda i: (0, 0)),
            pl.BlockSpec((1, out_dim), lambda i: (0, 0)),
        ],
        out_specs=pl.BlockSpec((tm, out_dim), lambda i: (i, 0)),
        compiler_params=pltpu.CompilerParams(
            dimension_semantics=("parallel",),
            vmem_limit_bytes=_VMEM_LIMIT),
        cost_estimate=pl.CostEstimate(
            flops=2 * rows_p * pdim * H + 2 * rows_p * H * out_dim,
            transcendentals=rows_p,
            bytes_accessed=itemsize * (rows_p * pdim + pdim * H + H * out_dim
                                       + 3 * H + out_dim + rows_p * out_dim)),
    )(patches, wsr_t, b_sr.reshape(1, H), gamma.reshape(1, H),
      beta.reshape(1, H), wkv_t, bkv.reshape(1, out_dim))
    return out[:rows] if rows_p != rows else out


# --------------------------------------------------------------------------
# Attention + output projection, heads folded in, query-tiled.
#   q: (B, S, H)   kv: (B, S_kv, 2H) packed [K | V]   -> out (B, S, H)
# --------------------------------------------------------------------------
def _attn_out_kernel(q_ref, kv_ref, wo_ref, bo_ref, o_ref, *,
                     num_heads, head_dim, scale):
    H = num_heads * head_dim
    q = q_ref[0]            # (tq, H)
    kv = kv_ref[0]          # (S_kv, 2H)

    ctx_parts = []
    for h in range(num_heads):          # unrolled; static lane slices
        lo = h * head_dim
        q_h = q[:, lo:lo + head_dim] * scale          # pre-scale: O(tq*hd)
        k_h = kv[:, lo:lo + head_dim]
        v_h = kv[:, H + lo:H + lo + head_dim]
        s = lax.dot_general(
            q_h, k_h, dimension_numbers=(((1,), (1,)), ((), ())),
            preferred_element_type=jnp.float32)        # (tq, S_kv)
        m = jnp.max(s, axis=-1, keepdims=True)
        p = jnp.exp(s - m)
        denom = jnp.sum(p, axis=-1, keepdims=True)
        ctx_h = jnp.dot(p.astype(kv.dtype), v_h,
                        preferred_element_type=jnp.float32)   # (tq, hd)
        # normalize after P@V: reciprocal on EUP, O(tq*hd) multiplies
        ctx_parts.append(ctx_h * pl.reciprocal(denom, approx=True))
        # TODO(synk): training-mode attention-probs dropout; eval = identity.

    ctx = ctx_parts[0] if num_heads == 1 else jnp.concatenate(ctx_parts, -1)
    out = lax.dot_general(
        ctx.astype(wo_ref.dtype), wo_ref[...],
        dimension_numbers=(((1,), (0,)), ((), ())),
        preferred_element_type=jnp.float32)
    o_ref[0] = (out + bo_ref[...].astype(jnp.float32)).astype(o_ref.dtype)


def _attention_output(q, kv, wo_t, bo, *, num_heads, head_dim, tq_max=512):
    B, S, H = q.shape
    S_kv = kv.shape[1]
    scale = float(head_dim) ** -0.5
    itemsize = jnp.dtype(q.dtype).itemsize

    tq = min(tq_max, _round_up(S, 8))
    S_p = _round_up(S, tq)
    if S_p != S:
        q = jnp.pad(q, ((0, 0), (0, S_p - S), (0, 0)))

    out = pl.pallas_call(
        functools.partial(_attn_out_kernel, num_heads=num_heads,
                          head_dim=head_dim, scale=scale),
        out_shape=jax.ShapeDtypeStruct((B, S_p, H), q.dtype),
        grid=(B, S_p // tq),
        in_specs=[
            pl.BlockSpec((1, tq, H), lambda b, i: (b, i, 0)),
            pl.BlockSpec((1, S_kv, 2 * H), lambda b, i: (b, 0, 0)),
            pl.BlockSpec((H, H), lambda b, i: (0, 0)),
            pl.BlockSpec((1, H), lambda b, i: (0, 0)),
        ],
        out_specs=pl.BlockSpec((1, tq, H), lambda b, i: (b, i, 0)),
        compiler_params=pltpu.CompilerParams(
            dimension_semantics=("parallel", "parallel"),
            vmem_limit_bytes=_VMEM_LIMIT),
        cost_estimate=pl.CostEstimate(
            flops=4 * B * S_p * S_kv * H + 2 * B * S_p * H * H,
            transcendentals=B * num_heads * S_p * S_kv,
            bytes_accessed=itemsize * (B * S_p * H + B * S_kv * 2 * H
                                       + H * H + H + B * S_p * H)),
    )(q, kv, wo_t, bo.reshape(1, H))
    return out[:, :S] if S_p != S else out


# --------------------------------------------------------------------------
# Full SegformerAttention forward.
# --------------------------------------------------------------------------
def segformer_attention(hidden_states, params, *, height, width,
                        num_heads, sr_ratio, ln_eps=1e-6):
    """hidden_states: (B, S, H) with S = height * width."""
    B, S, H = hidden_states.shape
    head_dim = H // num_heads
    x2d = hidden_states.reshape(B * S, H)

    # One-time tiny weight transposes: torch (out, in) -> (in, out); K/V fused.
    wq_t = jnp.transpose(params["wq"])
    wkv_t = jnp.transpose(jnp.concatenate([params["wk"], params["wv"]], axis=0))
    bkv = jnp.concatenate([params["bk"], params["bv"]], axis=0)
    wo_t = jnp.transpose(params["wo"])

    # Q projection (row-tiled dense).
    q = _dense(x2d, wq_t, params["bq"]).reshape(B, S, H)

    # K/V source: fused SR-conv + LayerNorm + K/V projection, or plain K/V.
    if sr_ratio > 1:
        h2, w2 = height // sr_ratio, width // sr_ratio
        # TODO(synk): fold this patchify transpose into the SR kernel via a
        # grid axis over the sr*sr taps + VMEM accumulator to avoid the extra
        # HBM copy of the activations.
        patches = hidden_states.reshape(B, h2, sr_ratio, w2, sr_ratio, H)
        patches = patches.transpose(0, 1, 3, 2, 4, 5).reshape(
            B * h2 * w2, sr_ratio * sr_ratio * H)
        # conv weight (O, I, kh, kw) -> (kh, kw, I, O) -> (sr*sr*I, O)
        wsr_t = params["w_sr"].transpose(2, 3, 1, 0).reshape(
            sr_ratio * sr_ratio * H, H)
        kv = _sr_ln_kv(patches, wsr_t, params["b_sr"],
                       params["g_ln"], params["b_ln"], wkv_t, bkv, eps=ln_eps)
        S_kv = h2 * w2
    else:
        kv = _dense(x2d, wkv_t, bkv)
        S_kv = S
    kv = kv.reshape(B, S_kv, 2 * H)

    # Attention (heads in-kernel) fused with the output projection.
    return _attention_output(q, kv, wo_t, params["bo"],
                             num_heads=num_heads, head_dim=head_dim)


# --------------------------------------------------------------------------
# Demo / self-check.
# --------------------------------------------------------------------------
if __name__ == "__main__":
    B = 2
    HIDDEN = 32
    NUM_HEADS = 2
    SR = 2
    HEIGHT = WIDTH = 8
    S = HEIGHT * WIDTH      # 64
    LN_EPS = 1e-6

    key = jax.random.PRNGKey(0)
    ks = jax.random.split(key, 13)

    hidden_states = jax.random.normal(ks[0], (B, S, HIDDEN), jnp.float32)

    def lin(kw, kb):
        return (jax.random.normal(kw, (HIDDEN, HIDDEN), jnp.float32) * 0.05,
                jax.random.normal(kb, (HIDDEN,), jnp.float32) * 0.05)

    wq, bq = lin(ks[1], ks[2])
    wk, bk = lin(ks[3], ks[4])
    wv, bv = lin(ks[5], ks[6])
    wo, bo = lin(ks[7], ks[8])
    w_sr = jax.random.normal(ks[9], (HIDDEN, HIDDEN, SR, SR), jnp.float32) * 0.05
    b_sr = jax.random.normal(ks[10], (HIDDEN,), jnp.float32) * 0.05
    g_ln = 1.0 + 0.1 * jax.random.normal(ks[11], (HIDDEN,), jnp.float32)
    b_ln = 0.1 * jax.random.normal(ks[12], (HIDDEN,), jnp.float32)

    params = dict(wq=wq, bq=bq, wk=wk, bk=bk, wv=wv, bv=bv, wo=wo, bo=bo,
                  w_sr=w_sr, b_sr=b_sr, g_ln=g_ln, b_ln=b_ln)

    out = segformer_attention(hidden_states, params, height=HEIGHT, width=WIDTH,
                              num_heads=NUM_HEADS, sr_ratio=SR, ln_eps=LN_EPS)
    out = jax.block_until_ready(out)

    # --- pure-JAX reference (same math as PyTorch eval mode) ---
    def reference(hs, p):
        q = hs @ p["wq"].T + p["bq"]
        kv_src = hs
        if SR > 1:
            x = hs.reshape(B, HEIGHT, WIDTH, HIDDEN).transpose(0, 3, 1, 2)
            y = lax.conv_general_dilated(
                x, p["w_sr"], (SR, SR), "VALID",
                dimension_numbers=("NCHW", "OIHW", "NCHW"))
            y = y + p["b_sr"][None, :, None, None]
            kv_src = y.reshape(B, HIDDEN, -1).transpose(0, 2, 1)
            mu = kv_src.mean(-1, keepdims=True)
            var = ((kv_src - mu) ** 2).mean(-1, keepdims=True)
            kv_src = (kv_src - mu) / jnp.sqrt(var + LN_EPS) * p["g_ln"] + p["b_ln"]
        k = kv_src @ p["wk"].T + p["bk"]
        v = kv_src @ p["wv"].T + p["bv"]
        hd = HIDDEN // NUM_HEADS

        def split(t):
            b, s, _ = t.shape
            return t.reshape(b, s, NUM_HEADS, hd).transpose(0, 2, 1, 3)

        qh, kh, vh = split(q), split(k), split(v)
        scores = jnp.einsum("bhqd,bhkd->bhqk", qh, kh) * (float(hd) ** -0.5)
        probs = jax.nn.softmax(scores, axis=-1)
        ctx = jnp.einsum("bhqk,bhkd->bhqd", probs, vh)
        ctx = ctx.transpose(0, 2, 1, 3).reshape(B, S, HIDDEN)
        return ctx @ p["wo"].T + p["bo"]

    ref = reference(hidden_states, params)
    assert out.shape == (B, S, HIDDEN)
    # Tolerance slightly loosened for the EUP approx-reciprocal softmax path.
    assert jnp.allclose(out, ref, atol=2e-3, rtol=2e-3), "mismatch vs reference"

    print("KERNEL_OK")
</pallas_src>

<mosaic_0001>
module attributes {stable_mosaic.version = 11 : i64} {
  func.func @_dense_kernel(%arg0: i32, %arg1: memref<128x32xf32, #tpu.memory_space<vmem>>, %arg2: memref<32x32xf32, #tpu.memory_space<vmem>>, %arg3: memref<1x32xf32, #tpu.memory_space<vmem>>, %arg4: memref<128x32xf32, #tpu.memory_space<vmem>>) attributes {dimension_semantics = [#tpu.dimension_semantics<parallel>], iteration_bounds = array<i64: 1>, scalar_prefetch = 0 : i64, scratch_operands = 0 : i64, tpu.core_type = #tpu.core_type<tc>, window_params = [{transform_indices = @transform_0, window_bounds = array<i64: 128, 32>}, {pipeline_mode = #tpu.pipeline_mode<synchronous>, transform_indices = @transform_1, window_bounds = array<i64: 32, 32>}, {pipeline_mode = #tpu.pipeline_mode<synchronous>, transform_indices = @transform_2, window_bounds = array<i64: 1, 32>}, {transform_indices = @transform_3, window_bounds = array<i64: 128, 32>}]} {
    %c0 = arith.constant 0 : index
    %c0_0 = arith.constant 0 : index
    %0 = vector.load %arg1[%c0, %c0_0] : memref<128x32xf32, #tpu.memory_space<vmem>>, vector<128x32xf32>
    %c0_1 = arith.constant 0 : index
    %c0_2 = arith.constant 0 : index
    %1 = vector.load %arg2[%c0_1, %c0_2] : memref<32x32xf32, #tpu.memory_space<vmem>>, vector<32x32xf32>
    %cst = arith.constant dense<0.000000e+00> : vector<128x32xf32>
    %2 = tpu.matmul %0, %1, %cst {dimension_numbers = #tpu.dot_dimension_numbers<[1], [0], [0], [1], [0, 0, 1, 1], [], []>} : vector<128x32xf32>, vector<32x32xf32>, vector<128x32xf32> -> vector<128x32xf32>
    %c0_3 = arith.constant 0 : index
    %c0_4 = arith.constant 0 : index
    %3 = vector.load %arg3[%c0_3, %c0_4] : memref<1x32xf32, #tpu.memory_space<vmem>>, vector<1x32xf32>
    %4 = vector.broadcast %3 : vector<1x32xf32> to vector<128x32xf32>
    %5 = arith.addf %2, %4 : vector<128x32xf32>
    %c0_5 = arith.constant 0 : index
    %c0_6 = arith.constant 0 : index
    %6 = vector.load %arg4[%c0_5, %c0_6] : memref<128x32xf32, #tpu.memory_space<vmem>>, vector<128x32xf32>
    tpu.vector_store %arg4[%c0_5, %c0_6], %5 {strides = array<i32>} : memref<128x32xf32, #tpu.memory_space<vmem>>, vector<128x32xf32>,
    return
  }
  func.func @transform_0(%arg0: i32) -> (i32, i32) {
    %c0_i32 = arith.constant 0 : i32
    %c0_i32_0 = arith.constant 0 : i32
    return %arg0, %c0_i32 : i32, i32
  }
  func.func @transform_1(%arg0: i32) -> (i32, i32) {
    %c0_i32 = arith.constant 0 : i32
    %c0_i32_0 = arith.constant 0 : i32
    %c0_i32_1 = arith.constant 0 : i32
    return %c0_i32, %c0_i32_0 : i32, i32
  }
  func.func @transform_2(%arg0: i32) -> (i32, i32) {
    %c0_i32 = arith.constant 0 : i32
    %c0_i32_0 = arith.constant 0 : i32
    %c0_i32_1 = arith.constant 0 : i32
    return %c0_i32, %c0_i32_0 : i32, i32
  }
  func.func @transform_3(%arg0: i32) -> (i32, i32) {
    %c0_i32 = arith.constant 0 : i32
    %c0_i32_0 = arith.constant 0 : i32
    return %arg0, %c0_i32 : i32, i32
  }
}

</mosaic_0001>

<llo_original>
// kernel: tpu_custom_call.1
$region0: #{tpu_custom_call.1}
  #allocation0 [shape = 'u32[]', space=smem, size = 0x4, offset = 0x4, fixed_abs, tag = 'smem constant byte address 0x4 - core index']
  #allocation1 [shape = 'u32[144,128]{1,0:T(1,128)}', space=vmem, size = 0x12000, scoped, tag = 'internal scratch']
  %s0 = inlined_call_operand.vmem [shape: f32[128,32], index: 0, kind: input, shape index: {}]
  %s1 = inlined_call_operand.vmem [shape: f32[32,32], index: 1, kind: input, shape index: {}]
  %s2 = inlined_call_operand.vmem [shape: f32[1,32], index: 2, kind: input, shape index: {}]
  %s3 = inlined_call_operand.vmem [shape: f32[128,32], index: 3, kind: output, shape index: {}]
  %s4 = sld [smem:[#allocation0]]
  $region22: #{tpu_custom_call.1} parent=0
    _
  %s6 = ssub.s32 1, %s4
  %s7 = scalar_select 0, %s6, %s4
  // Predicated region
  $region2: #{tpu_custom_call.1} parent=0 // pred_check
    _
  $region3: #{tpu_custom_call.1} parent=0 // pred_check_branch
    %9 = sbr.rel (0) target = $region5
  $region4: #{tpu_custom_call.1} parent=0 // pred_region
    _
  $region5: #{tpu_custom_call.1} parent=0 // pred_fallthru
    _
  // Predicated region
  $region6: #{tpu_custom_call.1} parent=0 // pred_check
    _
  $region7: #{tpu_custom_call.1} parent=0 // pred_check_branch
    %11 = sbr.rel (0) target = $region9
  $region8: #{tpu_custom_call.1} parent=0 // pred_region
    _
  $region9: #{tpu_custom_call.1} parent=0 // pred_fallthru
    _
  // Predicated region
  $region10: #{tpu_custom_call.1} parent=0 // pred_check
    _
  $region11: #{tpu_custom_call.1} parent=0 // pred_check_branch
    %13 = sbr.rel (0) target = $region13
  $region12: #{tpu_custom_call.1} parent=0 // pred_region
    _
  $region13: #{tpu_custom_call.1} parent=0 // pred_fallthru
    _
  %v14 = vld [vmem:[%s0] sm:$0xff]
  %v15 = vld [vmem:[%s0 + $0x8] sm:$0xff]
  %v16 = vld [vmem:[%s0 + $0x10] sm:$0xff]
  %v17 = vld [vmem:[%s0 + $0x18] sm:$0xff]
  %v18 = vld [vmem:[%s0 + $0x20] sm:$0xff]
  %v19 = vld [vmem:[%s0 + $0x28] sm:$0xff]
  %v20 = vld [vmem:[%s0 + $0x30] sm:$0xff]
  %v21 = vld [vmem:[%s0 + $0x38] sm:$0xff]
  %v22 = vld [vmem:[%s0 + $0x40] sm:$0xff]
  %v23 = vld [vmem:[%s0 + $0x48] sm:$0xff]
  %v24 = vld [vmem:[%s0 + $0x50] sm:$0xff]
  %v25 = vld [vmem:[%s0 + $0x58] sm:$0xff]
  %v26 = vld [vmem:[%s0 + $0x60] sm:$0xff]
  %v27 = vld [vmem:[%s0 + $0x68] sm:$0xff]
  %v28 = vld [vmem:[%s0 + $0x70] sm:$0xff]
  %v29 = vld [vmem:[%s0 + $0x78] sm:$0xff]
  %v30 = vld [vmem:[%s1] sm:$0xff]
  %v31 = vld [vmem:[%s1 + $0x8] sm:$0xff]
  %v32 = vld [vmem:[%s1 + $0x10] sm:$0xff]
  %v33 = vld [vmem:[%s1 + $0x18] sm:$0xff]
  %v34 = vld [vmem:[%s2] sm:$0x1]
  %v36 = vlaneseq
  %v37 = vshrl.u32 %v36, 7
  %v38 = vsub.s32 0, %v37
  %v39 = vrot.slane %v34, %v38
  %vm41 = vcmask 261120
  %v43 = vsel %vm41, %v14, 0
  %v46 = vsel %vm41, %v15, 0
  %v49 = vsel %vm41, %v16, 0
  %v52 = vsel %vm41, %v17, 0
  %v55 = vsel %vm41, %v18, 0
  %v58 = vsel %vm41, %v19, 0
  %v61 = vsel %vm41, %v20, 0
  %v64 = vsel %vm41, %v21, 0
  %v67 = vsel %vm41, %v22, 0
  %v70 = vsel %vm41, %v23, 0
  %v73 = vsel %vm41, %v24, 0
  %v76 = vsel %vm41, %v25, 0
  %v79 = vsel %vm41, %v26, 0
  %v82 = vsel %vm41, %v27, 0
  %v85 = vsel %vm41, %v28, 0
  %v88 = vsel %vm41, %v29, 0
  %90 = vmatprep.subr.mxu0 0.0
  %91 = vmatpush1.msra.mxu0 0.0
  %92 = vmatprep.subr.mxu0 0.0
  %93 = vmatpush1.msra.mxu0 0.0
  %94 = vmatprep.subr.mxu0 0.0
  %95 = vmatpush1.msra.mxu0 0.0
  %96 = vmatprep.subr.mxu0 0.0
  %97 = vmatpush1.msra.mxu0 0.0
  %98 = vmatprep.subr.mxu0 0.0
  %99 = vmatpush1.msra.mxu0 0.0
  %100 = vmatprep.subr.mxu0 0.0
  %101 = vmatpush1.msra.mxu0 0.0
  %102 = vmatprep.subr.mxu0 0.0
  %103 = vmatpush1.msra.mxu0 0.0
  %104 = vmatprep.subr.mxu0 0.0
  %105 = vmatpush1.msra.mxu0 0.0
  %106 = vmatprep.subr.mxu0 0.0
  %107 = vmatpush1.msra.mxu0 0.0
  %108 = vmatprep.subr.mxu0 0.0
  %109 = vmatpush1.msra.mxu0 0.0
  %110 = vmatprep.subr.mxu0 0.0
  %111 = vmatpush1.msra.mxu0 0.0
  %112 = vmatprep.subr.mxu0 0.0
  %113 = vmatpush1.msra.mxu0 0.0
  %114 = vmatprep.subr.mxu0 0.0
  %115 = vmatpush1.msra.mxu0 %v33
  %116 = vmatprep.subr.mxu0 0.0
  %117 = vmatpush1.msra.mxu0 %v32
  %118 = vmatprep.subr.mxu0 0.0
  %119 = vmatpush1.msra.mxu0 %v31
  %120 = vmatprep.subr.mxu0 0.0
  %121 = vmatpush1.msra.mxu0 %v30
  %122 = vmatprep.subr.mxu0 0.0
  %123 = vmatpush2.msra.mxu0 0.0
  %124 = vmatprep.subr.mxu0 0.0
  %125 = vmatpush2.msra.mxu0 0.0
  %126 = vmatprep.subr.mxu0 0.0
  %127 = vmatpush2.msra.mxu0 0.0
  %128 = vmatprep.subr.mxu0 0.0
  %129 = vmatpush2.msra.mxu0 0.0
  %130 = vmatprep.subr.mxu0 0.0
  %131 = vmatpush2.msra.mxu0 0.0
  %132 = vmatprep.subr.mxu0 0.0
  %133 = vmatpush2.msra.mxu0 0.0
  %134 = vmatprep.subr.mxu0 0.0
  %135 = vmatpush2.msra.mxu0 0.0
  %136 = vmatprep.subr.mxu0 0.0
  %137 = vmatpush2.msra.mxu0 0.0
  %138 = vmatprep.subr.mxu0 0.0
  %139 = vmatpush2.msra.mxu0 0.0
  %140 = vmatprep.subr.mxu0 0.0
  %141 = vmatpush2.msra.mxu0 0.0
  %142 = vmatprep.subr.mxu0 0.0
  %143 = vmatpush2.msra.mxu0 0.0
  %144 = vmatprep.subr.mxu0 0.0
  %145 = vmatpush2.msra.mxu0 0.0
  %146 = vmatprep.subr.mxu0 0.0
  %147 = vmatpush2.msra.mxu0 0.0
  %148 = vmatprep.subr.mxu0 0.0
  %149 = vmatpush2.msra.mxu0 0.0
  %150 = vmatprep.subr.mxu0 0.0
  %151 = vmatpush2.msra.mxu0 0.0
  %152 = vmatprep.subr.mxu0 0.0
  %153 = vmatpush2.msra.mxu0 0.0
  %154 = vmatprep.mubr.f32.mxu0 0.0
  %155 = vmatmul.mubr.f32.gmra.mxu0 %v43
  %v156 = vpop.f32.mrf.mxu0
  %v157 = vadd.f32 %v39, %v156
  %v158 = vpop.f32.mrf.mxu0
  %159 = vmatprep.mubr.f32.mxu0 0.0
  %160 = vmatmul.mubr.f32.gmra.mxu0 %v46
  %v161 = vpop.f32.mrf.mxu0
  %v162 = vadd.f32 %v39, %v161
  %v163 = vpop.f32.mrf.mxu0
  %164 = vmatprep.mubr.f32.mxu0 0.0
  %165 = vmatmul.mubr.f32.gmra.mxu0 %v49
  %v166 = vpop.f32.mrf.mxu0
  %v167 = vadd.f32 %v39, %v166
  %v168 = vpop.f32.mrf.mxu0
  %169 = vmatprep.mubr.f32.mxu0 0.0
  %170 = vmatmul.mubr.f32.gmra.mxu0 %v52
  %v171 = vpop.f32.mrf.mxu0
  %v172 = vadd.f32 %v39, %v171
  %v173 = vpop.f32.mrf.mxu0
  %174 = vmatprep.mubr.f32.mxu0 0.0
  %175 = vmatmul.mubr.f32.gmra.mxu0 %v55
  %v176 = vpop.f32.mrf.mxu0
  %v177 = vadd.f32 %v39, %v176
  %v178 = vpop.f32.mrf.mxu0
  %179 = vmatprep.mubr.f32.mxu0 0.0
  %180 = vmatmul.mubr.f32.gmra.mxu0 %v58
  %v181 = vpop.f32.mrf.mxu0
  %v182 = vadd.f32 %v39, %v181
  %v183 = vpop.f32.mrf.mxu0
  %184 = vmatprep.mubr.f32.mxu0 0.0
  %185 = vmatmul.mubr.f32.gmra.mxu0 %v61
  %v186 = vpop.f32.mrf.mxu0
  %v187 = vadd.f32 %v39, %v186
  %v188 = vpop.f32.mrf.mxu0
  %189 = vmatprep.mubr.f32.mxu0 0.0
  %190 = vmatmul.mubr.f32.gmra.mxu0 %v64
  %v191 = vpop.f32.mrf.mxu0
  %v192 = vadd.f32 %v39, %v191
  %v193 = vpop.f32.mrf.mxu0
  %194 = vmatprep.mubr.f32.mxu0 0.0
  %195 = vmatmul.mubr.f32.gmra.mxu0 %v67
  %v196 = vpop.f32.mrf.mxu0
  %v197 = vadd.f32 %v39, %v196
  %v198 = vpop.f32.mrf.mxu0
  %199 = vmatprep.mubr.f32.mxu0 0.0
  %200 = vmatmul.mubr.f32.gmra.mxu0 %v70
  %v201 = vpop.f32.mrf.mxu0
  %v202 = vadd.f32 %v39, %v201
  %v203 = vpop.f32.mrf.mxu0
  %204 = vmatprep.mubr.f32.mxu0 0.0
  %205 = vmatmul.mubr.f32.gmra.mxu0 %v73
  %v206 = vpop.f32.mrf.mxu0
  %v207 = vadd.f32 %v39, %v206
  %v208 = vpop.f32.mrf.mxu0
  %209 = vmatprep.mubr.f32.mxu0 0.0
  %210 = vmatmul.mubr.f32.gmra.mxu0 %v76
  %v211 = vpop.f32.mrf.mxu0
  %v212 = vadd.f32 %v39, %v211
  %v213 = vpop.f32.mrf.mxu0
  %214 = vmatprep.mubr.f32.mxu0 0.0
  %215 = vmatmul.mubr.f32.gmra.mxu0 %v79
  %v216 = vpop.f32.mrf.mxu0
  %v217 = vadd.f32 %v39, %v216
  %v218 = vpop.f32.mrf.mxu0
  %219 = vmatprep.mubr.f32.mxu0 0.0
  %220 = vmatmul.mubr.f32.gmra.mxu0 %v82
  %v221 = vpop.f32.mrf.mxu0
  %v222 = vadd.f32 %v39, %v221
  %v223 = vpop.f32.mrf.mxu0
  %224 = vmatprep.mubr.f32.mxu0 0.0
  %225 = vmatmul.mubr.f32.gmra.mxu0 %v85
  %v226 = vpop.f32.mrf.mxu0
  %v227 = vadd.f32 %v39, %v226
  %v228 = vpop.f32.mrf.mxu0
  %229 = vmatprep.mubr.f32.mxu0 0.0
  %230 = vmatmul.mubr.f32.gmra.mxu0 %v88
  %v231 = vpop.f32.mrf.mxu0
  %v232 = vadd.f32 %v39, %v231
  %v233 = vpop.f32.mrf.mxu0
  %234 = vdwg.mxu0
  %235 = vst.msk [vmem:[%s3] sm:$0xff] %vm41, %v157
  %236 = vst.msk [vmem:[%s3 + $0x8] sm:$0xff] %vm41, %v162
  %237 = vst.msk [vmem:[%s3 + $0x10] sm:$0xff] %vm41, %v167
  %238 = vst.msk [vmem:[%s3 + $0x18] sm:$0xff] %vm41, %v172
  %239 = vst.msk [vmem:[%s3 + $0x20] sm:$0xff] %vm41, %v177
  %240 = vst.msk [vmem:[%s3 + $0x28] sm:$0xff] %vm41, %v182
  %241 = vst.msk [vmem:[%s3 + $0x30] sm:$0xff] %vm41, %v187
  %242 = vst.msk [vmem:[%s3 + $0x38] sm:$0xff] %vm41, %v192
  %243 = vst.msk [vmem:[%s3 + $0x40] sm:$0xff] %vm41, %v197
  %244 = vst.msk [vmem:[%s3 + $0x48] sm:$0xff] %vm41, %v202
  %245 = vst.msk [vmem:[%s3 + $0x50] sm:$0xff] %vm41, %v207
  %246 = vst.msk [vmem:[%s3 + $0x58] sm:$0xff] %vm41, %v212
  %247 = vst.msk [vmem:[%s3 + $0x60] sm:$0xff] %vm41, %v217
  %248 = vst.msk [vmem:[%s3 + $0x68] sm:$0xff] %vm41, %v222
  %249 = vst.msk [vmem:[%s3 + $0x70] sm:$0xff] %vm41, %v227
  %250 = vst.msk [vmem:[%s3 + $0x78] sm:$0xff] %vm41, %v232
  // Predicated region
  $region14: #{tpu_custom_call.1} parent=0 // pred_check
    _
  $region15: #{tpu_custom_call.1} parent=0 // pred_check_branch
    %252 = sbr.rel (0) target = $region17
  $region16: #{tpu_custom_call.1} parent=0 // pred_region
    _
  $region17: #{tpu_custom_call.1} parent=0 // pred_fallthru
    _
  // Predicated region
  $region18: #{tpu_custom_call.1} parent=0 // pred_check
    _
  $region19: #{tpu_custom_call.1} parent=0 // pred_check_branch
    %254 = sbr.rel (0) target = $region21
  $region20: #{tpu_custom_call.1} parent=0 // pred_region
    _
  $region21: #{tpu_custom_call.1} parent=0 // pred_fallthru
    _

</llo_original>
